<compile_context>
chip_gen: v5e
topology: v5e:2x2
jax: 0.10.0
libtpu: 0.0.40
codegen_flags: <defaults>
</compile_context>

<pallas_src>
import functools
import math

import jax
import jax.numpy as jnp
from jax import lax
from jax.experimental import pallas as pl
from jax.experimental.pallas import tpu as pltpu


def _round_up(x, m):
    return (x + m - 1) // m * m


def _largest_divisor_tile(extent_pad, cap, unit=128):
    """Largest multiple of `unit` that divides `extent_pad` and is <= cap."""
    n_units = extent_pad // unit
    max_d = max(cap // unit, 1)
    for d in range(min(max_d, n_units), 0, -1):
        if n_units % d == 0:
            return d * unit
    return unit


def _rbm_kernel_single_k(x_ref, w_ref, b_ref, o_ref, *, compute_dtype):
    """Fused tile: o = sigmoid(x @ w.T + b); whole K fits in one block."""
    a = x_ref[...]
    w = w_ref[...]
    if compute_dtype is not None:
        a = a.astype(compute_dtype)          # in-register cast; HBM stays f32
        w = w.astype(compute_dtype)
    z = lax.dot_general(
        a, w,
        dimension_numbers=(((1,), (1,)), ((), ())),   # contract K of both
        preferred_element_type=jnp.float32,
    )
    z = z + b_ref[...].astype(jnp.float32)
    o_ref[...] = jax.nn.sigmoid(z).astype(o_ref.dtype)


def _rbm_kernel_multi_k(x_ref, w_ref, b_ref, o_ref, acc_ref, *, compute_dtype):
    """Tiled K reduction with f32 accumulator; bias + sigmoid in the epilogue."""
    k = pl.program_id(2)

    @pl.when(k == 0)
    def _():
        acc_ref[...] = jnp.zeros_like(acc_ref)

    a = x_ref[...]
    w = w_ref[...]
    if compute_dtype is not None:
        a = a.astype(compute_dtype)
        w = w.astype(compute_dtype)
    acc_ref[...] += lax.dot_general(
        a, w,
        dimension_numbers=(((1,), (1,)), ((), ())),
        preferred_element_type=jnp.float32,
    )

    @pl.when(k == pl.num_programs(2) - 1)
    def _():
        z = acc_ref[...] + b_ref[...].astype(jnp.float32)
        o_ref[...] = jax.nn.sigmoid(z).astype(o_ref.dtype)


def rbm_forward(x, weight, bias_hidden, *, compute_dtype=jnp.bfloat16,
                tm_cap=256, tn_cap=512, tk_cap=2048,
                vmem_limit_bytes=48 * 1024 * 1024):
    """Pallas implementation of RBM.forward (linear + bias + sigmoid).

    compute_dtype: dtype used to feed the MXU (cast per-tile inside the
    kernel; accumulation, bias and sigmoid stay in f32). Use None for
    f32-exact results.
    """
    num_out, num_in = weight.shape
    x2 = x.reshape(-1, num_in)                        # x.view(-1, num_in)
    M, K = x2.shape
    N = num_out
    out_dtype = x2.dtype

    # --- tile selection ----------------------------------------------------
    # M (sublane): pad to a multiple of 16 (bf16 packed-vreg friendly).
    if M <= tm_cap:
        tm = _round_up(max(M, 1), 16)
        M_pad = tm
    else:
        tm = tm_cap
        M_pad = _round_up(M, tm)

    # N / K (lane): pad only to the next multiple of 128; tiles divide the
    # padded extent exactly -> no extra weight bytes streamed from HBM.
    N_pad = _round_up(N, 128)
    K_pad = _round_up(K, 128)

    # v7x megacore: give the 'parallel' N axis >= 2 grid points when possible.
    n_cap = tn_cap
    if N_pad >= 256:
        n_cap = min(tn_cap, max(128, N_pad // 2))
    tn = _largest_divisor_tile(N_pad, n_cap)
    tk = _largest_divisor_tile(K_pad, tk_cap)

    # Zero-pad only when needed: K padding contributes 0 to the contraction;
    # padded M rows / N cols are sliced off the output.
    if (M_pad, K_pad) != (M, K):
        x2 = jnp.pad(x2, ((0, M_pad - M), (0, K_pad - K)))
    w = weight
    if (N_pad, K_pad) != (N, K):
        w = jnp.pad(w, ((0, N_pad - N), (0, K_pad - K)))
    b = bias_hidden
    if N_pad != N:
        b = jnp.pad(b, ((0, 0), (0, N_pad - N)))

    nm, nn, nk = M_pad // tm, N_pad // tn, K_pad // tk

    if nk == 1:
        grid = (nm, nn)
        in_specs = [
            pl.BlockSpec((tm, tk), lambda i, j: (i, 0)),   # x tile
            pl.BlockSpec((tn, tk), lambda i, j: (j, 0)),   # weight tile (N,K)
            pl.BlockSpec((1, tn), lambda i, j: (0, j)),    # bias tile
        ]
        out_specs = pl.BlockSpec((tm, tn), lambda i, j: (i, j))
        scratch_shapes = []
        kernel = functools.partial(_rbm_kernel_single_k,
                                   compute_dtype=compute_dtype)
        dims = ("parallel", "parallel")
    else:
        grid = (nm, nn, nk)
        in_specs = [
            pl.BlockSpec((tm, tk), lambda i, j, k: (i, k)),
            pl.BlockSpec((tn, tk), lambda i, j, k: (j, k)),
            pl.BlockSpec((1, tn), lambda i, j, k: (0, j)),
        ]
        out_specs = pl.BlockSpec((tm, tn), lambda i, j, k: (i, j))
        scratch_shapes = [pltpu.VMEM((tm, tn), jnp.float32)]
        kernel = functools.partial(_rbm_kernel_multi_k,
                                   compute_dtype=compute_dtype)
        dims = ("parallel", "parallel", "arbitrary")

    bytes_accessed = int(
        M_pad * K_pad * x2.dtype.itemsize
        + N_pad * K_pad * w.dtype.itemsize
        + M_pad * N_pad * jnp.dtype(out_dtype).itemsize
        + N_pad * b.dtype.itemsize
    )
    cost = pl.CostEstimate(
        flops=2 * M_pad * N_pad * K_pad,
        transcendentals=M_pad * N_pad,
        bytes_accessed=bytes_accessed,
    )

    y_pad = pl.pallas_call(
        kernel,
        out_shape=jax.ShapeDtypeStruct((M_pad, N_pad), out_dtype),
        grid_spec=pltpu.PrefetchScalarGridSpec(
            num_scalar_prefetch=0,
            grid=grid,
            in_specs=in_specs,
            out_specs=out_specs,
            scratch_shapes=scratch_shapes,
        ),
        compiler_params=pltpu.CompilerParams(
            dimension_semantics=dims,
            vmem_limit_bytes=vmem_limit_bytes,
        ),
        cost_estimate=cost,
    )(x2, w, b)

    if (M_pad, N_pad) != (M, N):
        y_pad = y_pad[:M, :N]
    return y_pad


def rbm_forward_ref(x, weight, bias_hidden):
    """Pure-JAX reference mirroring the PyTorch forward."""
    x2 = x.reshape(-1, weight.shape[1])
    return jax.nn.sigmoid(x2 @ weight.T + bias_hidden)


def _make_params(key, batch, num_in, num_out):
    k_x, k_w, k_bh = jax.random.split(key, 3)
    x = jax.random.normal(k_x, (batch, num_in), dtype=jnp.float32)
    weight = jax.random.normal(k_w, (num_out, num_in), dtype=jnp.float32) / math.sqrt(
        num_in + num_out
    )
    bias_hidden = jax.random.normal(k_bh, (1, num_out), dtype=jnp.float32)
    return x, weight, bias_hidden


if __name__ == "__main__":
    key = jax.random.PRNGKey(0)
    k0, k1, k2, k3 = jax.random.split(key, 4)

    # 1) Primary shapes from the module spec (aligned, fused single-K path).
    num_in, num_out, batch = 256, 128, 8
    x, weight, bias_hidden = _make_params(k0, batch, num_in, num_out)

    y_f32 = jax.block_until_ready(
        rbm_forward(x, weight, bias_hidden, compute_dtype=None))
    y_ref = rbm_forward_ref(x, weight, bias_hidden)
    assert y_f32.shape == (batch, num_out)
    assert jnp.allclose(y_f32, y_ref, atol=1e-5, rtol=1e-5)

    y_bf16 = jax.block_until_ready(
        rbm_forward(x, weight, bias_hidden))          # in-kernel bf16, f32 accum
    assert jnp.allclose(y_bf16, y_ref, atol=2e-2, rtol=2e-2)

    # 2) Ragged shapes (exercise the 128-multiple padding path; f32 exact).
    num_in_r, num_out_r, batch_r = 200, 100, 5
    xr, wr, br = _make_params(k1, batch_r, num_in_r, num_out_r)
    yr = jax.block_until_ready(rbm_forward(xr, wr, br, compute_dtype=None))
    yr_ref = rbm_forward_ref(xr, wr, br)
    assert yr.shape == (batch_r, num_out_r)
    assert jnp.allclose(yr, yr_ref, atol=1e-4, rtol=1e-4)

    # 3) K=1152: now fits one K tile -> fused kernel, zero K padding,
    #    and N_pad=256 splits into 2 parallel N tiles (v7x megacore).
    num_in_k, num_out_k, batch_k = 1152, 256, 16
    xk, wk, bk = _make_params(k2, batch_k, num_in_k, num_out_k)
    yk = jax.block_until_ready(rbm_forward(xk, wk, bk))
    yk_ref = rbm_forward_ref(xk, wk, bk)
    assert yk.shape == (batch_k, num_out_k)
    assert jnp.allclose(yk, yk_ref, atol=2e-2, rtol=2e-2)

    # 4) K > tk_cap: exercises the multi-K accumulator kernel
    #    (K_pad=2560 -> tk=1280, nk=2; no extra K padding).
    num_in_m, num_out_m, batch_m = 2560, 128, 8
    xm, wm, bm = _make_params(k3, batch_m, num_in_m, num_out_m)
    ym = jax.block_until_ready(rbm_forward(xm, wm, bm, compute_dtype=None))
    ym_ref = rbm_forward_ref(xm, wm, bm)
    assert ym.shape == (batch_m, num_out_m)
    assert jnp.allclose(ym, ym_ref, atol=1e-4, rtol=1e-4)

    # TODO(synk): visible_to_hidden / hidden_to_visible / contrastive_divergence /
    # gibbs_sample use bernoulli sampling + dropout (stochastic, training-time);
    # only the deterministic forward is kernelized.

    print("KERNEL_OK")
</pallas_src>

<mosaic_0001>
module attributes {stable_mosaic.version = 11 : i64} {
  func.func @_rbm_kernel_single_k(%arg0: i32, %arg1: i32, %arg2: memref<16x256xf32, #tpu.memory_space<vmem>>, %arg3: memref<128x256xf32, #tpu.memory_space<vmem>>, %arg4: memref<1x128xf32, #tpu.memory_space<vmem>>, %arg5: memref<16x128xf32, #tpu.memory_space<vmem>>) attributes {dimension_semantics = [#tpu.dimension_semantics<parallel>, #tpu.dimension_semantics<parallel>], iteration_bounds = array<i64: 1, 1>, scalar_prefetch = 0 : i64, scratch_operands = 0 : i64, tpu.core_type = #tpu.core_type<tc>, window_params = [{transform_indices = @transform_0, window_bounds = array<i64: 16, 256>}, {transform_indices = @transform_1, window_bounds = array<i64: 128, 256>}, {transform_indices = @transform_2, window_bounds = array<i64: 1, 128>}, {transform_indices = @transform_3, window_bounds = array<i64: 16, 128>}]} {
    %c0 = arith.constant 0 : index
    %c0_0 = arith.constant 0 : index
    %0 = vector.load %arg2[%c0, %c0_0] : memref<16x256xf32, #tpu.memory_space<vmem>>, vector<16x256xf32>
    %c0_1 = arith.constant 0 : index
    %c0_2 = arith.constant 0 : index
    %1 = vector.load %arg3[%c0_1, %c0_2] : memref<128x256xf32, #tpu.memory_space<vmem>>, vector<128x256xf32>
    %cst = arith.constant dense<0.000000e+00> : vector<16x128xf32>
    %2 = tpu.matmul %0, %1, %cst {dimension_numbers = #tpu.dot_dimension_numbers<[1], [1], [0], [0], [0, 0, 1, 0], [], []>} : vector<16x256xf32>, vector<128x256xf32>, vector<16x128xf32> -> vector<16x128xf32>
    %c0_3 = arith.constant 0 : index
    %c0_4 = arith.constant 0 : index
    %3 = vector.load %arg4[%c0_3, %c0_4] : memref<1x128xf32, #tpu.memory_space<vmem>>, vector<1x128xf32>
    %4 = vector.broadcast %3 : vector<1x128xf32> to vector<16x128xf32>
    %5 = arith.addf %2, %4 : vector<16x128xf32>
    %6 = arith.negf %5 : vector<16x128xf32>
    %7 = math.exp %6 : vector<16x128xf32>
    %cst_5 = arith.constant 1.000000e+00 : f32
    %8 = vector.broadcast %cst_5 : f32 to vector<16x128xf32>
    %9 = arith.addf %8, %7 : vector<16x128xf32>
    %10 = arith.divf %8, %9 : vector<16x128xf32>
    %c0_6 = arith.constant 0 : index
    %c0_7 = arith.constant 0 : index
    %11 = vector.load %arg5[%c0_6, %c0_7] : memref<16x128xf32, #tpu.memory_space<vmem>>, vector<16x128xf32>
    tpu.vector_store %arg5[%c0_6, %c0_7], %10 {strides = array<i32>} : memref<16x128xf32, #tpu.memory_space<vmem>>, vector<16x128xf32>,
    return
  }
  func.func @transform_0(%arg0: i32, %arg1: i32) -> (i32, i32) {
    %c0_i32 = arith.constant 0 : i32
    %c0_i32_0 = arith.constant 0 : i32
    return %arg0, %c0_i32 : i32, i32
  }
  func.func @transform_1(%arg0: i32, %arg1: i32) -> (i32, i32) {
    %c0_i32 = arith.constant 0 : i32
    %c0_i32_0 = arith.constant 0 : i32
    return %arg1, %c0_i32 : i32, i32
  }
  func.func @transform_2(%arg0: i32, %arg1: i32) -> (i32, i32) {
    %c0_i32 = arith.constant 0 : i32
    %c0_i32_0 = arith.constant 0 : i32
    return %c0_i32, %arg1 : i32, i32
  }
  func.func @transform_3(%arg0: i32, %arg1: i32) -> (i32, i32) {
    %c0_i32 = arith.constant 0 : i32
    return %arg0, %arg1 : i32, i32
  }
}

</mosaic_0001>

<llo_original>
// kernel: tpu_custom_call.1
$region0: #{tpu_custom_call.1}
  #allocation0 [shape = 'u32[]', space=smem, size = 0x4, offset = 0x4, fixed_abs, tag = 'smem constant byte address 0x4 - core index']
  #allocation1 [shape = 'u32[72,128]{1,0:T(1,128)}', space=vmem, size = 0x9000, scoped, tag = 'internal scratch']
  %s0 = inlined_call_operand.hbm [shape: f32[16,256], index: 0, kind: input, shape index: {}]
  %s1 = inlined_call_operand.hbm [shape: f32[128,256], index: 1, kind: input, shape index: {}]
  %s2 = inlined_call_operand.vmem [shape: f32[1,128], index: 2, kind: input, shape index: {}]
  %s3 = inlined_call_operand.hbm [shape: f32[16,128], index: 3, kind: output, shape index: {}]
  %s4 = sld [smem:[#allocation0]]
  $region30: #{tpu_custom_call.1} parent=0
    _
  %s6 = ssub.s32 1, %s4
  %s7 = scalar_select 0, %s6, %s4
  $region1: #{tpu_custom_call.1} parent=0
    #allocation2 [shape = 'u8[16384]{0}', space=vmem, size = 0x4000, scoped, tag = 'input window, operand 0, single buffered']
    #allocation3 [shape = 's32[1]{0}', space=sflag, size = 0x4, scoped, tag = 'scoped memory for tpu_custom_call.1']
    #allocation4 [shape = 's32[1]{0}', space=sflag, size = 0x4, scoped, tag = 'scoped memory for tpu_custom_call.1']
    #allocation5 [shape = 'u8[131072]{0}', space=vmem, size = 0x20000, scoped, tag = 'input window, operand 1, single buffered']
    #allocation6 [shape = 's32[1]{0}', space=sflag, size = 0x4, scoped, tag = 'scoped memory for tpu_custom_call.1']
    #allocation7 [shape = 'u8[8192]{0}', space=vmem, size = 0x2000, scoped, tag = 'output window, operand 0, single buffered']
    %8 = vsyncpa [#allocation3], 0
    %9 = vsyncpa [#allocation6], 0
    %10 = vsyncpa [#allocation4], 0
    // Predicated region
    $region2: #{tpu_custom_call.1} parent=1 // pred_check
      _
    $region3: #{tpu_custom_call.1} parent=1 // pred_check_branch
      %12 = sbr.rel (0) target = $region5
    $region4: #{tpu_custom_call.1} parent=1 // pred_region
      %14 = vsyncadd [#allocation3], 0
      %s15 = sshll.u32 %s0, 4
      %s16 = int_to_ptr.hbm [resolvable:$true] %s15
      %s17 = sshll.u32 [#allocation2], 4
      %s18 = int_to_ptr.vmem [resolvable:$true] %s17
      %23 = dma.hbm_to_vmem [thread:$0]  %s16, 512, %s18, [#allocation3], 256, 256, 16
    $region5: #{tpu_custom_call.1} parent=1 // pred_fallthru
      _
    // Predicated region
    $region6: #{tpu_custom_call.1} parent=1 // pred_check
      _
    $region7: #{tpu_custom_call.1} parent=1 // pred_check_branch
      %25 = sbr.rel (0) target = $region9
    $region8: #{tpu_custom_call.1} parent=1 // pred_region
      %27 = vsyncadd [#allocation6], 0
      %s28 = sshll.u32 %s1, 4
      %s29 = int_to_ptr.hbm [resolvable:$true] %s28
      %s30 = sshll.u32 [#allocation5], 4
      %s31 = int_to_ptr.vmem [resolvable:$true] %s30
      %36 = dma.hbm_to_vmem [thread:$0]  %s29, 4096, %s31, [#allocation6], 256, 256, 16
    $region9: #{tpu_custom_call.1} parent=1 // pred_fallthru
      _
    // Predicated region
    $region10: #{tpu_custom_call.1} parent=1 // pred_check
      _
    $region11: #{tpu_custom_call.1} parent=1 // pred_check_branch
      %38 = sbr.rel (0) target = $region13
    $region12: #{tpu_custom_call.1} parent=1 // pred_region
      _
    $region13: #{tpu_custom_call.1} parent=1 // pred_fallthru
      _
    // Predicated region
    $region14: #{tpu_custom_call.1} parent=1 // pred_check
      _
    $region15: #{tpu_custom_call.1} parent=1 // pred_check_branch
      %40 = sbr.rel (0) target = $region17
    $region16: #{tpu_custom_call.1} parent=1 // pred_region
      %42 = dma.done [#allocation3], 512
    $region17: #{tpu_custom_call.1} parent=1 // pred_fallthru
      _
    // Predicated region
    $region18: #{tpu_custom_call.1} parent=1 // pred_check
      _
    $region19: #{tpu_custom_call.1} parent=1 // pred_check_branch
      %44 = sbr.rel (0) target = $region21
    $region20: #{tpu_custom_call.1} parent=1 // pred_region
      %46 = dma.done [#allocation6], 4096
    $region21: #{tpu_custom_call.1} parent=1 // pred_fallthru
      _
    %v47 = vld [vmem:[#allocation2] sm:$0xff]
    %v48 = vld [vmem:[#allocation2 + $0x8] sm:$0xff]
    %v49 = vld [vmem:[#allocation2 + $0x10] sm:$0xff]
    %v50 = vld [vmem:[#allocation2 + $0x18] sm:$0xff]
    %v51 = vld [vmem:[#allocation5] sm:$0xff]
    %v52 = vld [vmem:[#allocation5 + $0x8] sm:$0xff]
    %v53 = vld [vmem:[#allocation5 + $0x10] sm:$0xff]
    %v54 = vld [vmem:[#allocation5 + $0x18] sm:$0xff]
    %v55 = vld [vmem:[#allocation5 + $0x20] sm:$0xff]
    %v56 = vld [vmem:[#allocation5 + $0x28] sm:$0xff]
    %v57 = vld [vmem:[#allocation5 + $0x30] sm:$0xff]
    %v58 = vld [vmem:[#allocation5 + $0x38] sm:$0xff]
    %v59 = vld [vmem:[#allocation5 + $0x40] sm:$0xff]
    %v60 = vld [vmem:[#allocation5 + $0x48] sm:$0xff]
    %v61 = vld [vmem:[#allocation5 + $0x50] sm:$0xff]
    %v62 = vld [vmem:[#allocation5 + $0x58] sm:$0xff]
    %v63 = vld [vmem:[#allocation5 + $0x60] sm:$0xff]
    %v64 = vld [vmem:[#allocation5 + $0x68] sm:$0xff]
    %v65 = vld [vmem:[#allocation5 + $0x70] sm:$0xff]
    %v66 = vld [vmem:[#allocation5 + $0x78] sm:$0xff]
    %v67 = vld [vmem:[#allocation5 + $0x80] sm:$0xff]
    %v68 = vld [vmem:[#allocation5 + $0x88] sm:$0xff]
    %v69 = vld [vmem:[#allocation5 + $0x90] sm:$0xff]
    %v70 = vld [vmem:[#allocation5 + $0x98] sm:$0xff]
    %v71 = vld [vmem:[#allocation5 + $0xa0] sm:$0xff]
    %v72 = vld [vmem:[#allocation5 + $0xa8] sm:$0xff]
    %v73 = vld [vmem:[#allocation5 + $0xb0] sm:$0xff]
    %v74 = vld [vmem:[#allocation5 + $0xb8] sm:$0xff]
    %v75 = vld [vmem:[#allocation5 + $0xc0] sm:$0xff]
    %v76 = vld [vmem:[#allocation5 + $0xc8] sm:$0xff]
    %v77 = vld [vmem:[#allocation5 + $0xd0] sm:$0xff]
    %v78 = vld [vmem:[#allocation5 + $0xd8] sm:$0xff]
    %v79 = vld [vmem:[#allocation5 + $0xe0] sm:$0xff]
    %v80 = vld [vmem:[#allocation5 + $0xe8] sm:$0xff]
    %v81 = vld [vmem:[#allocation5 + $0xf0] sm:$0xff]
    %v82 = vld [vmem:[#allocation5 + $0xf8] sm:$0xff]
    %v83 = vld [vmem:[%s2] sm:$0x1]
    %v85 = vperm.slane %v83, 0
    %87 = vmatpush.xpose.msra.mxu0 %v81
    %88 = vmatpush.xpose.msra.mxu0 %v79
    %89 = vmatpush.xpose.msra.mxu0 %v77
    %90 = vmatpush.xpose.msra.mxu0 %v75
    %91 = vmatpush.xpose.msra.mxu0 %v73
    %92 = vmatpush.xpose.msra.mxu0 %v71
    %93 = vmatpush.xpose.msra.mxu0 %v69
    %94 = vmatpush.xpose.msra.mxu0 %v67
    %95 = vmatpush.xpose.msra.mxu0 %v65
    %96 = vmatpush.xpose.msra.mxu0 %v63
    %97 = vmatpush.xpose.msra.mxu0 %v61
    %98 = vmatpush.xpose.msra.mxu0 %v59
    %99 = vmatpush.xpose.msra.mxu0 %v57
    %100 = vmatpush.xpose.msra.mxu0 %v55
    %101 = vmatpush.xpose.msra.mxu0 %v53
    %102 = vmatpush.xpose.msra.mxu0 %v51
    %103 = vmatmul.f32.gmra.mxu0 %v47
    %v104 = vpop.f32.mrf.mxu0
    %v105 = vadd.f32 %v85, %v104
    %106 = vmatmul.f32.gmra.mxu0 %v49
    %v107 = vpop.f32.mrf.mxu0
    %v108 = vadd.f32 %v85, %v107
    %109 = vdwg.mxu0
    %110 = vmatpush.xpose.msra.mxu0 %v82
    %111 = vmatpush.xpose.msra.mxu0 %v80
    %112 = vmatpush.xpose.msra.mxu0 %v78
    %113 = vmatpush.xpose.msra.mxu0 %v76
    %114 = vmatpush.xpose.msra.mxu0 %v74
    %115 = vmatpush.xpose.msra.mxu0 %v72
    %116 = vmatpush.xpose.msra.mxu0 %v70
    %117 = vmatpush.xpose.msra.mxu0 %v68
    %118 = vmatpush.xpose.msra.mxu0 %v66
    %119 = vmatpush.xpose.msra.mxu0 %v64
    %120 = vmatpush.xpose.msra.mxu0 %v62
    %121 = vmatpush.xpose.msra.mxu0 %v60
    %122 = vmatpush.xpose.msra.mxu0 %v58
    %123 = vmatpush.xpose.msra.mxu0 %v56
    %124 = vmatpush.xpose.msra.mxu0 %v54
    %125 = vmatpush.xpose.msra.mxu0 %v52
    %126 = vmatmul.f32.gmra.mxu0 %v48
    %v127 = vpop.f32.mrf.mxu0
    %v128 = vadd.f32 %v105, %v127
    %129 = vmatmul.f32.gmra.mxu0 %v50
    %v130 = vpop.f32.mrf.mxu0
    %v131 = vadd.f32 %v108, %v130
    %132 = vdwg.mxu0
    %v133 = vxor.u32 %v128, 2147483648
    %v134 = vxor.u32 %v131, 2147483648
    %v135 = vmul.f32 %v133, 1.442695
    %v136 = vpow.pop %v135
    %v137 = vmul.f32 %v134, 1.442695
    %v138 = vpow.pop %v137
    %v139 = vadd.f32 %v136, 1.0
    %v140 = vadd.f32 %v138, 1.0
    %v141 = vrcp.pop %v139
    %v142 = vmul.f32 %v139, %v141
    %v143 = vsub.f32 1.0, %v142
    %v144 = vmul.f32 %v141, %v143
    %v145 = vadd.f32 %v141, %v144
    %vm146 = vweird.f32 %v139
    %vm147 = vweird.f32 %v141
    %vm148 = vmor %vm146, %vm147
    %v149 = vsel %vm148, %v141, %v145
    %v150 = vand.u32 2147483647, %v139
    %vm151 = vcmp.eq.f32.partialorder %v150, 8.507059e+37
    %v152 = vand.u32 %v139, 2147483648
    %v153 = vor.u32 1.1754944e-38, %v152
    %v154 = vsel %vm151, %v153, %v149
    %v155 = vmul.f32 1.0, %v154
    %v156 = vrcp.pop %v140
    %v157 = vmul.f32 %v140, %v156
    %v158 = vsub.f32 1.0, %v157
    %v159 = vmul.f32 %v156, %v158
    %v160 = vadd.f32 %v156, %v159
    %vm161 = vweird.f32 %v140
    %vm162 = vweird.f32 %v156
    %vm163 = vmor %vm161, %vm162
    %v164 = vsel %vm163, %v156, %v160
    %v165 = vand.u32 2147483647, %v140
    %vm166 = vcmp.eq.f32.partialorder %v165, 8.507059e+37
    %v167 = vand.u32 %v140, 2147483648
    %v168 = vor.u32 1.1754944e-38, %v167
    %v169 = vsel %vm166, %v168, %v164
    %v170 = vmul.f32 1.0, %v169
    %171 = vst [vmem:[#allocation7] sm:$0xff] %v155
    %172 = vst [vmem:[#allocation7 + $0x8] sm:$0xff] %v170
    // Predicated region
    $region22: #{tpu_custom_call.1} parent=1 // pred_check
      _
    $region23: #{tpu_custom_call.1} parent=1 // pred_check_branch
      %174 = sbr.rel (0) target = $region25
    $region24: #{tpu_custom_call.1} parent=1 // pred_region
      %176 = vsyncadd [#allocation4], 0
      %s177 = sshll.u32 [#allocation7], 4
      %s178 = int_to_ptr.vmem [resolvable:$true] %s177
      %s179 = sshll.u32 %s3, 4
      %s180 = int_to_ptr.hbm [resolvable:$true] %s179
      %185 = dma.vmem_to_hbm [thread:$0]  %s178, 256, %s180, [#allocation4], 128, 128, 8
    $region25: #{tpu_custom_call.1} parent=1 // pred_fallthru
      _
    // Predicated region
    $region26: #{tpu_custom_call.1} parent=1 // pred_check
      _
    $region27: #{tpu_custom_call.1} parent=1 // pred_check_branch
      %187 = sbr.rel (0) target = $region29
    $region28: #{tpu_custom_call.1} parent=1 // pred_region
      %189 = dma.done [#allocation4], 256
    $region29: #{tpu_custom_call.1} parent=1 // pred_fallthru
      _
    %190 = vsyncpa [#allocation3], 1
    %191 = vsyncpa [#allocation6], 1
    %192 = vsyncpa [#allocation4], 1

</llo_original>
